<compile_context>
chip_gen: v6e
topology: v6e:2x2x1
jax: 0.10.0
libtpu: 0.0.40
codegen_flags: <defaults>
</compile_context>

<pallas_src>
import functools

import jax
import jax.numpy as jnp
from jax import lax
from jax.experimental import pallas as pl
from jax.experimental.pallas import tpu as pltpu

SMOOTH = 1.0  # options.DICE.SMOOTH (deterministic in-script init)

_LOSS_SHORT_NAMES = {"DiceLoss": "dice", "BCEDiceLoss": "bcedice", "BCELoss": "bce"}

MAX_BLOCK_ROWS = 2048     # 2048 rows x 128 lanes x 4 B = 1 MiB per f32 input block
MIN_FEAT_TILE = 512       # >=512-row blocks sit on the ~85% HBM-roofline plateau
FEAT_ROW_TILE = 512       # fixed feature tile used when rows must be padded anyway
MXU_FOLD_MIN_ROWS = 256   # below this the ones-matmul fold is not worth MXU latency
SUB = 8                   # sublane height of the per-sample partial-sum blocks


def _stats_kernel(pred_ref, tgt_ref, inter_ref, sums_ref, bce_ref, *, mxu_fold):
    j = pl.program_id(1)  # feature-tile (reduction) axis

    p = pred_ref[...].astype(jnp.float32)   # (bt, row_tile, 128)
    t = tgt_ref[...].astype(jnp.float32)
    bt, row_tile, lanes = p.shape
    groups = row_tile // SUB

    # Elementwise statistics (VPU + EUP).  gt may be a soft target, so keep the
    # two-log clamped form (matches torch.nn.BCELoss exactly).  The BCE partial
    # is accumulated UN-negated: t*logp + (1-t)*log1mp; negated once in XLA.
    inter_e = p * t
    sums_e = p + t                            # one reduce for pred.sum + target.sum
    logp = jnp.maximum(jnp.log(p), -100.0)
    log1mp = jnp.maximum(jnp.log(1.0 - p), -100.0)
    bce_e = t * (logp - log1mp) + log1mp

    if mxu_fold:
        # bt == 1: sublane-reduce on the otherwise-idle MXU.  The LHS has ones
        # in sublane 0 only, so row 0 of the (8, 128) result holds the column
        # sums and rows 1..7 are exactly zero (the XLA combine sums everything).
        sel = jnp.where(
            lax.broadcasted_iota(jnp.int32, (SUB, row_tile), 0) == 0, 1.0, 0.0
        ).astype(jnp.float32)

        def fold(x):
            return jnp.dot(sel, x[0],
                           precision=lax.Precision.HIGHEST,
                           preferred_element_type=jnp.float32)[None]
    else:
        # bt > 1 (many small samples per block): cheap cross-vreg VPU partial
        # reduce to vreg-shaped (bt, 8, 128); the tiny cross-lane step is
        # deferred to XLA.
        def fold(x):
            if groups == 1:
                return x
            return jnp.sum(x.reshape(bt, groups, SUB, lanes), axis=1)

    @pl.when(j == 0)
    def _():
        inter_ref[...] = jnp.zeros_like(inter_ref)
        sums_ref[...] = jnp.zeros_like(sums_ref)
        bce_ref[...] = jnp.zeros_like(bce_ref)

    # Folds hoisted out of the j==0 / j>0 branches: zero-init above, always add.
    inter_ref[...] += fold(inter_e)
    sums_ref[...] += fold(sums_e)
    bce_ref[...] += fold(bce_e)


def _round_up(x, m):
    return ((x + m - 1) // m) * m


def _choose_feature_tiling(rows_raw):
    """Return (rows_padded, row_tile): rows_padded % row_tile == 0, row_tile % 8 == 0."""
    rows8 = _round_up(rows_raw, SUB)
    if rows8 <= MAX_BLOCK_ROWS:
        return rows8, rows8          # whole (padded) sample per block
    # Prefer an existing multiple-of-8 divisor on the >=512-row plateau (no padding).
    for d in range(MAX_BLOCK_ROWS, MIN_FEAT_TILE - 1, -8):
        if rows8 % d == 0:
            return rows8, d
    # Otherwise zero-pad up to a fixed friendly tile.  Exact: padded p = t = 0
    # contribute 0 to intersection, sums and BCE (given the -100 log clamp) and
    # the BCE divisor uses the original element count.
    return _round_up(rows_raw, FEAT_ROW_TILE), FEAT_ROW_TILE


def _choose_batch_tile(n, rows):
    """Largest divisor of n with bt*rows <= MAX_BLOCK_ROWS, keeping grid[0] >= 2
    so the batch axis can be sharded across both v7x TensorCores."""
    limit = n if n == 1 else n // 2
    bt = 1
    for d in range(1, limit + 1):
        if n % d == 0 and d * rows <= MAX_BLOCK_ROWS:
            bt = d
    return bt


@jax.jit
def _run_loss_kernel(pred, gt, smooth=SMOOTH):
    n = pred.shape[0]
    f = 1
    for d in pred.shape[1:]:
        f *= d

    # No wrapper upcast: DMA native dtypes, cast to f32 inside the kernel.
    p2 = pred.reshape(n, f)
    t2 = gt.reshape(n, f)

    rows, row_tile = _choose_feature_tiling(pl.cdiv(f, 128))
    padded_f = rows * 128
    if padded_f != f:
        p2 = jnp.pad(p2, ((0, 0), (0, padded_f - f)))
        t2 = jnp.pad(t2, ((0, 0), (0, padded_f - f)))
    p3 = p2.reshape(n, rows, 128)
    t3 = t2.reshape(n, rows, 128)

    bt = _choose_batch_tile(n, rows) if row_tile == rows else 1
    grid = (n // bt, rows // row_tile)
    mxu_fold = (bt == 1) and (row_tile >= MXU_FOLD_MIN_ROWS)

    kernel = functools.partial(_stats_kernel, mxu_fold=mxu_fold)

    out_shape = tuple(
        jax.ShapeDtypeStruct((n, SUB, 128), jnp.float32) for _ in range(3))

    cost = pl.CostEstimate(
        flops=9 * n * padded_f,
        transcendentals=2 * n * padded_f,
        bytes_accessed=int(p3.size * p3.dtype.itemsize
                           + t3.size * t3.dtype.itemsize
                           + 3 * n * SUB * 128 * 4),
    )

    # NOTE: pipeline_mode=pl.Buffered(3) on the two input specs is a cheap
    # xprof-gated follow-up experiment; not enabled by default.
    inter_p, sums_p, bce_p = pl.pallas_call(
        kernel,
        out_shape=out_shape,
        grid_spec=pltpu.PrefetchScalarGridSpec(
            num_scalar_prefetch=0,
            grid=grid,
            in_specs=[
                pl.BlockSpec((bt, row_tile, 128), lambda b, j: (b, j, 0)),
                pl.BlockSpec((bt, row_tile, 128), lambda b, j: (b, j, 0)),
            ],
            out_specs=[
                pl.BlockSpec((bt, SUB, 128), lambda b, j: (b, 0, 0)),
                pl.BlockSpec((bt, SUB, 128), lambda b, j: (b, 0, 0)),
                pl.BlockSpec((bt, SUB, 128), lambda b, j: (b, 0, 0)),
            ],
        ),
        compiler_params=pltpu.CompilerParams(
            dimension_semantics=("parallel", "arbitrary"),
            vmem_limit_bytes=32 * 1024 * 1024,  # explicit: v5e scoped default is 16 MiB
        ),
        cost_estimate=cost,
    )(p3, t3)

    # Tiny final combine in XLA (3 * N * 8 * 128 elements).
    inter_s = jnp.sum(inter_p, axis=(1, 2))     # (N,)  sum(pred * target)
    sums_s = jnp.sum(sums_p, axis=(1, 2))       # (N,)  pred.sum + target.sum
    bce_s = jnp.sum(bce_p, axis=(1, 2))         # (N,)  un-negated BCE sum

    dice_per = (2.0 * inter_s + smooth) / (sums_s + smooth)
    dice = 1.0 - jnp.sum(dice_per) / n
    bce = -jnp.sum(bce_s) / (n * f)             # mean over ORIGINAL element count
    return dice, bce, dice + bce


def loss_logger(pred, gt, loss_fun="DiceLoss"):
    """JAX/Pallas equivalent of LossLogger.forward.

    Returns (selected_loss, {'loss/dice': ..., 'loss/bce': ..., 'loss/bcedice': ...}).
    """
    dice, bce, bcedice = _run_loss_kernel(pred, gt)
    losses = {"loss/dice": dice, "loss/bce": bce, "loss/bcedice": bcedice}
    return losses["loss/" + _LOSS_SHORT_NAMES[loss_fun]], losses


def _reference(pred, gt, smooth=SMOOTH):
    n = pred.shape[0]
    p = pred.reshape(n, -1).astype(jnp.float32)
    t = gt.reshape(n, -1).astype(jnp.float32)
    inter = jnp.sum(p * t, axis=1)
    dice_per = (2.0 * inter + smooth) / (jnp.sum(p, 1) + jnp.sum(t, 1) + smooth)
    dice = 1.0 - jnp.sum(dice_per) / n
    logp = jnp.maximum(jnp.log(p), -100.0)
    log1mp = jnp.maximum(jnp.log(1.0 - p), -100.0)
    bce = jnp.mean(-(t * logp + (1.0 - t) * log1mp))
    return dice, bce, bce + dice


if __name__ == "__main__":
    root = jax.random.PRNGKey(0)

    def run_case(idx, shape, rtol, atol):
        k1, k2 = jax.random.split(jax.random.fold_in(root, idx))
        # pred in (0,1) (post-sigmoid probabilities), gt binary mask.
        pred = jax.nn.sigmoid(jax.random.normal(k1, shape, jnp.float32))
        gt = (jax.random.uniform(k2, shape) > 0.5).astype(jnp.float32)

        selected, losses = loss_logger(pred, gt, loss_fun="DiceLoss")
        jax.block_until_ready(selected)

        ref_dice, ref_bce, ref_bcedice = _reference(pred, gt)
        assert jnp.allclose(losses["loss/dice"], ref_dice, rtol=rtol, atol=atol), shape
        assert jnp.allclose(losses["loss/bce"], ref_bce, rtol=rtol, atol=atol), shape
        assert jnp.allclose(losses["loss/bcedice"], ref_bcedice, rtol=rtol, atol=atol), shape
        assert jnp.allclose(selected, losses["loss/dice"])

    # Small NCHW case (whole-sample blocks, grid=(2, 1)).
    run_case(0, (2, 4, 16, 16), 1e-5, 1e-5)
    # Multi-sample blocks (bt=2) exercising the VPU-fold branch, grid=(2, 1).
    run_case(1, (4, 4, 16, 16), 1e-5, 1e-5)
    # Awkward per-sample size (F % 128 != 0) exercising exact zero-padding.
    run_case(2, (2, 3, 17, 19), 1e-5, 1e-5)
    # Larger sample exercising feature tiling, row padding, MXU fold, grid=(2, 5).
    run_case(3, (2, 2056, 128), 1e-4, 1e-5)

    print("KERNEL_OK")
</pallas_src>

<mosaic_0001>
module attributes {stable_mosaic.version = 11 : i64} {
  func.func @_stats_kernel(%arg0: i32, %arg1: i32, %arg2: memref<1x8x128xf32, #tpu.memory_space<vmem>>, %arg3: memref<1x8x128xf32, #tpu.memory_space<vmem>>, %arg4: memref<1x8x128xf32, #tpu.memory_space<vmem>>, %arg5: memref<1x8x128xf32, #tpu.memory_space<vmem>>, %arg6: memref<1x8x128xf32, #tpu.memory_space<vmem>>) attributes {dimension_semantics = [#tpu.dimension_semantics<parallel>, #tpu.dimension_semantics<arbitrary>], iteration_bounds = array<i64: 2, 1>, scalar_prefetch = 0 : i64, scratch_operands = 0 : i64, tpu.core_type = #tpu.core_type<tc>, window_params = [{transform_indices = @transform_0, window_bounds = array<i64: 1, 8, 128>}, {transform_indices = @transform_1, window_bounds = array<i64: 1, 8, 128>}, {transform_indices = @transform_2, window_bounds = array<i64: 1, 8, 128>}, {transform_indices = @transform_3, window_bounds = array<i64: 1, 8, 128>}, {transform_indices = @transform_4, window_bounds = array<i64: 1, 8, 128>}]} {
    %c0 = arith.constant 0 : index
    %c0_0 = arith.constant 0 : index
    %c0_1 = arith.constant 0 : index
    %0 = vector.load %arg2[%c0, %c0_0, %c0_1] : memref<1x8x128xf32, #tpu.memory_space<vmem>>, vector<1x8x128xf32>
    %c0_2 = arith.constant 0 : index
    %c0_3 = arith.constant 0 : index
    %c0_4 = arith.constant 0 : index
    %1 = vector.load %arg3[%c0_2, %c0_3, %c0_4] : memref<1x8x128xf32, #tpu.memory_space<vmem>>, vector<1x8x128xf32>
    %2 = arith.mulf %0, %1 : vector<1x8x128xf32>
    %3 = arith.addf %0, %1 : vector<1x8x128xf32>
    %4 = math.log %0 : vector<1x8x128xf32>
    %cst = arith.constant -1.000000e+02 : f32
    %5 = vector.broadcast %cst : f32 to vector<1x8x128xf32>
    %6 = arith.maximumf %4, %5 : vector<1x8x128xf32>
    %cst_5 = arith.constant 1.000000e+00 : f32
    %7 = vector.broadcast %cst_5 : f32 to vector<1x8x128xf32>
    %8 = arith.subf %7, %0 : vector<1x8x128xf32>
    %9 = math.log %8 : vector<1x8x128xf32>
    %cst_6 = arith.constant -1.000000e+02 : f32
    %10 = vector.broadcast %cst_6 : f32 to vector<1x8x128xf32>
    %11 = arith.maximumf %9, %10 : vector<1x8x128xf32>
    %12 = arith.subf %6, %11 : vector<1x8x128xf32>
    %13 = arith.mulf %1, %12 : vector<1x8x128xf32>
    %14 = arith.addf %13, %11 : vector<1x8x128xf32>
    %c0_i32 = arith.constant 0 : i32
    %15 = arith.cmpi eq, %arg1, %c0_i32 : i32
    %16 = arith.extui %15 : i1 to i32
    %c0_i32_7 = arith.constant 0 : i32
    %17 = arith.cmpi ne, %16, %c0_i32_7 : i32
    scf.if %17 {
      %cst_26 = arith.constant 0.000000e+00 : f32
      %27 = vector.broadcast %cst_26 : f32 to vector<1x8x128xf32>
      %c0_27 = arith.constant 0 : index
      %c0_28 = arith.constant 0 : index
      %c0_29 = arith.constant 0 : index
      %28 = vector.load %arg4[%c0_27, %c0_28, %c0_29] : memref<1x8x128xf32, #tpu.memory_space<vmem>>, vector<1x8x128xf32>
      tpu.vector_store %arg4[%c0_27, %c0_28, %c0_29], %27 {strides = array<i32>} : memref<1x8x128xf32, #tpu.memory_space<vmem>>, vector<1x8x128xf32>,
      %cst_30 = arith.constant 0.000000e+00 : f32
      %29 = vector.broadcast %cst_30 : f32 to vector<1x8x128xf32>
      %c0_31 = arith.constant 0 : index
      %c0_32 = arith.constant 0 : index
      %c0_33 = arith.constant 0 : index
      %30 = vector.load %arg5[%c0_31, %c0_32, %c0_33] : memref<1x8x128xf32, #tpu.memory_space<vmem>>, vector<1x8x128xf32>
      tpu.vector_store %arg5[%c0_31, %c0_32, %c0_33], %29 {strides = array<i32>} : memref<1x8x128xf32, #tpu.memory_space<vmem>>, vector<1x8x128xf32>,
      %cst_34 = arith.constant 0.000000e+00 : f32
      %31 = vector.broadcast %cst_34 : f32 to vector<1x8x128xf32>
      %c0_35 = arith.constant 0 : index
      %c0_36 = arith.constant 0 : index
      %c0_37 = arith.constant 0 : index
      %32 = vector.load %arg6[%c0_35, %c0_36, %c0_37] : memref<1x8x128xf32, #tpu.memory_space<vmem>>, vector<1x8x128xf32>
      tpu.vector_store %arg6[%c0_35, %c0_36, %c0_37], %31 {strides = array<i32>} : memref<1x8x128xf32, #tpu.memory_space<vmem>>, vector<1x8x128xf32>,
    } else {
    }
    %c0_8 = arith.constant 0 : index
    %c0_9 = arith.constant 0 : index
    %c0_10 = arith.constant 0 : index
    %18 = vector.load %arg4[%c0_8, %c0_9, %c0_10] : memref<1x8x128xf32, #tpu.memory_space<vmem>>, vector<1x8x128xf32>
    %19 = arith.addf %18, %2 : vector<1x8x128xf32>
    %c0_11 = arith.constant 0 : index
    %c0_12 = arith.constant 0 : index
    %c0_13 = arith.constant 0 : index
    %20 = vector.load %arg4[%c0_11, %c0_12, %c0_13] : memref<1x8x128xf32, #tpu.memory_space<vmem>>, vector<1x8x128xf32>
    tpu.vector_store %arg4[%c0_11, %c0_12, %c0_13], %19 {strides = array<i32>} : memref<1x8x128xf32, #tpu.memory_space<vmem>>, vector<1x8x128xf32>,
    %c0_14 = arith.constant 0 : index
    %c0_15 = arith.constant 0 : index
    %c0_16 = arith.constant 0 : index
    %21 = vector.load %arg5[%c0_14, %c0_15, %c0_16] : memref<1x8x128xf32, #tpu.memory_space<vmem>>, vector<1x8x128xf32>
    %22 = arith.addf %21, %3 : vector<1x8x128xf32>
    %c0_17 = arith.constant 0 : index
    %c0_18 = arith.constant 0 : index
    %c0_19 = arith.constant 0 : index
    %23 = vector.load %arg5[%c0_17, %c0_18, %c0_19] : memref<1x8x128xf32, #tpu.memory_space<vmem>>, vector<1x8x128xf32>
    tpu.vector_store %arg5[%c0_17, %c0_18, %c0_19], %22 {strides = array<i32>} : memref<1x8x128xf32, #tpu.memory_space<vmem>>, vector<1x8x128xf32>,
    %c0_20 = arith.constant 0 : index
    %c0_21 = arith.constant 0 : index
    %c0_22 = arith.constant 0 : index
    %24 = vector.load %arg6[%c0_20, %c0_21, %c0_22] : memref<1x8x128xf32, #tpu.memory_space<vmem>>, vector<1x8x128xf32>
    %25 = arith.addf %24, %14 : vector<1x8x128xf32>
    %c0_23 = arith.constant 0 : index
    %c0_24 = arith.constant 0 : index
    %c0_25 = arith.constant 0 : index
    %26 = vector.load %arg6[%c0_23, %c0_24, %c0_25] : memref<1x8x128xf32, #tpu.memory_space<vmem>>, vector<1x8x128xf32>
    tpu.vector_store %arg6[%c0_23, %c0_24, %c0_25], %25 {strides = array<i32>} : memref<1x8x128xf32, #tpu.memory_space<vmem>>, vector<1x8x128xf32>,
    return
  }
  func.func @transform_0(%arg0: i32, %arg1: i32) -> (i32, i32, i32) {
    %c0_i32 = arith.constant 0 : i32
    %c0_i32_0 = arith.constant 0 : i32
    return %arg0, %arg1, %c0_i32 : i32, i32, i32
  }
  func.func @transform_1(%arg0: i32, %arg1: i32) -> (i32, i32, i32) {
    %c0_i32 = arith.constant 0 : i32
    %c0_i32_0 = arith.constant 0 : i32
    return %arg0, %arg1, %c0_i32 : i32, i32, i32
  }
  func.func @transform_2(%arg0: i32, %arg1: i32) -> (i32, i32, i32) {
    %c0_i32 = arith.constant 0 : i32
    %c0_i32_0 = arith.constant 0 : i32
    %c0_i32_1 = arith.constant 0 : i32
    return %arg0, %c0_i32, %c0_i32_0 : i32, i32, i32
  }
  func.func @transform_3(%arg0: i32, %arg1: i32) -> (i32, i32, i32) {
    %c0_i32 = arith.constant 0 : i32
    %c0_i32_0 = arith.constant 0 : i32
    %c0_i32_1 = arith.constant 0 : i32
    return %arg0, %c0_i32, %c0_i32_0 : i32, i32, i32
  }
  func.func @transform_4(%arg0: i32, %arg1: i32) -> (i32, i32, i32) {
    %c0_i32 = arith.constant 0 : i32
    %c0_i32_0 = arith.constant 0 : i32
    %c0_i32_1 = arith.constant 0 : i32
    return %arg0, %c0_i32, %c0_i32_0 : i32, i32, i32
  }
}

</mosaic_0001>

<llo_original>
// kernel: _run_loss_kernel.1
$region0: #{_run_loss_kernel.1}
  #allocation0 [shape = 'u32[]', space=smem, size = 0x4, offset = 0x4, fixed_abs, tag = 'smem constant byte address 0x4 - core index']
  #allocation1 [shape = 'u32[144,128]{1,0:T(1,128)}', space=vmem, size = 0x12000, scoped, tag = 'internal scratch']
  %s0 = inlined_call_operand.vmem [shape: f32[2,8,128], index: 0, kind: input, shape index: {}]
  %s1 = inlined_call_operand.vmem [shape: f32[2,8,128], index: 1, kind: input, shape index: {}]
  %s2 = inlined_call_operand.vmem [shape: f32[2,8,128], index: 2, kind: output, shape index: {0}]
  %s3 = inlined_call_operand.vmem [shape: f32[2,8,128], index: 3, kind: output, shape index: {1}]
  %s4 = inlined_call_operand.vmem [shape: f32[2,8,128], index: 4, kind: output, shape index: {2}]
  %5 = xla_tuple %s2, %s3, %s4
  %s6 = sld [smem:[#allocation0]]
  $region61: #{_run_loss_kernel.1} parent=0
    _
  %s8 = ssub.s32 1, %s6
  %s9 = scalar_select 0, %s8, %s6
  loop: start=0, step=1, limit=4
  $region2: #{_run_loss_kernel.1} parent=0 // loop_pre_header
    _
  $region3: #{_run_loss_kernel.1} parent=0 // loop_header
    %s11 = sphi 0, %s15
    %p12 = scmp.ge.s32.totalorder %s11, 4
    %s18 = sphi 0, %s30
    %s19 = sphi 0, %s26
    %s20 = sphi 0, %s18
    %s21 = sphi 0, %s19
    %s22 = sphi 0, %s20
    %s23 = sphi 0, %s21
    %s35 = sphi 0, %s37
    %s38 = sphi 0, %s35
    %s39 = sphi 0, %s38
    %s55 = sphi 0, %s39
    %s63 = sphi 0, %s65
    %s66 = sphi 0, %s63
    %s67 = sphi 0, %s66
    %s83 = sphi 0, %s67
    %s89 = sphi 0, %s91
    %s92 = sphi 0, %s89
    %s93 = sphi 0, %s92
    %s109 = sphi 0, %s93
    %s115 = sphi 0, %s117
    %s118 = sphi 0, %s115
    %s119 = sphi 0, %s118
    %s135 = sphi 0, %s119
    %s141 = sphi 0, %s143
    %s144 = sphi 0, %s141
    %s145 = sphi 0, %s144
    %s161 = sphi 0, %s145
  $region4: #{_run_loss_kernel.1} parent=0 // loop_header_branch
    %14 = sbr.rel (%p12) target = $region8
  $region5: #{_run_loss_kernel.1} parent=0 // loop_body
    %s16 = ssub.s32 %s11, 1
    %s17 = ssub.s32 %s11, 2
    %s24 = sadd.s32 1, %s19
    %p25 = scmp.ge.s32.totalorder %s24, 1
    %s26 = scalar_select %p25, 0, %s24
    %s27 = sadd.s32 1, %s18
    %s28 = scalar_select %p25, %s27, %s18
    %p29 = scmp.ge.s32.totalorder %s28, 2
    %s30 = scalar_select %p29, 0, %s28
    %s31 = ssub.s32 %s18, %s30
    %s32 = ssub.s32 %s19, %s26
    %s33 = sor.u32 %s31, %s32
    %p34 = scmp.eq.s32.totalorder %s33, 0
    %s36 = sadd.s32 %s35, 1
    %s37 = scalar_select %p34, %s35, %s36
    %p40 = pneg %p34
    %p41 = scmp.eq.s32.totalorder %s11, 1
    %p42 = por %p40, %p41
    %p43 = scmp.ne.s32.totalorder %s35, %s38
    %p44 = scmp.eq.s32.totalorder %s11, 0
    %p45 = por %p43, %p44
    %p46 = scmp.ne.s32.totalorder %s35, %s38
    %p47 = scmp.eq.s32.totalorder %s16, 1
    %p48 = por %p46, %p47
    %p49 = scmp.ne.s32.totalorder %s38, %s39
    %p50 = scmp.eq.s32.totalorder %s16, 0
    %p51 = por %p49, %p50
    %p52 = scmp.ne.s32.totalorder %s38, %s39
    %p53 = scmp.eq.s32.totalorder %s17, 1
    %p54 = por %p52, %p53
    %p56 = scmp.ne.s32.totalorder %s39, %s55
    %p57 = scmp.eq.s32.totalorder %s17, 0
    %p58 = por %p56, %p57
    %s59 = ssub.s32 %s18, %s30
    %s60 = ssub.s32 %s19, %s26
    %s61 = sor.u32 %s59, %s60
    %p62 = scmp.eq.s32.totalorder %s61, 0
    %s64 = sadd.s32 %s63, 1
    %s65 = scalar_select %p62, %s63, %s64
    %p68 = pneg %p62
    %p69 = scmp.eq.s32.totalorder %s11, 1
    %p70 = por %p68, %p69
    %p71 = scmp.ne.s32.totalorder %s63, %s66
    %p72 = scmp.eq.s32.totalorder %s11, 0
    %p73 = por %p71, %p72
    %p74 = scmp.ne.s32.totalorder %s63, %s66
    %p75 = scmp.eq.s32.totalorder %s16, 1
    %p76 = por %p74, %p75
    %p77 = scmp.ne.s32.totalorder %s66, %s67
    %p78 = scmp.eq.s32.totalorder %s16, 0
    %p79 = por %p77, %p78
    %p80 = scmp.ne.s32.totalorder %s66, %s67
    %p81 = scmp.eq.s32.totalorder %s17, 1
    %p82 = por %p80, %p81
    %p84 = scmp.ne.s32.totalorder %s67, %s83
    %p85 = scmp.eq.s32.totalorder %s17, 0
    %p86 = por %p84, %p85
    %s87 = ssub.s32 %s18, %s30
    %p88 = scmp.eq.s32.totalorder %s87, 0
    %s90 = sadd.s32 %s89, 1
    %s91 = scalar_select %p88, %s89, %s90
    %p94 = pneg %p88
    %p95 = scmp.eq.s32.totalorder %s11, 1
    %p96 = por %p94, %p95
    %p97 = scmp.ne.s32.totalorder %s89, %s92
    %p98 = scmp.eq.s32.totalorder %s11, 0
    %p99 = por %p97, %p98
    %p100 = scmp.ne.s32.totalorder %s89, %s92
    %p101 = scmp.eq.s32.totalorder %s16, 1
    %p102 = por %p100, %p101
    %p103 = scmp.ne.s32.totalorder %s92, %s93
    %p104 = scmp.eq.s32.totalorder %s16, 0
    %p105 = por %p103, %p104
    %p106 = scmp.ne.s32.totalorder %s92, %s93
    %p107 = scmp.eq.s32.totalorder %s17, 1
    %p108 = por %p106, %p107
    %p110 = scmp.ne.s32.totalorder %s93, %s109
    %p111 = scmp.eq.s32.totalorder %s17, 0
    %p112 = por %p110, %p111
    %s113 = ssub.s32 %s18, %s30
    %p114 = scmp.eq.s32.totalorder %s113, 0
    %s116 = sadd.s32 %s115, 1
    %s117 = scalar_select %p114, %s115, %s116
    %p120 = pneg %p114
    %p121 = scmp.eq.s32.totalorder %s11, 1
    %p122 = por %p120, %p121
    %p123 = scmp.ne.s32.totalorder %s115, %s118
    %p124 = scmp.eq.s32.totalorder %s11, 0
    %p125 = por %p123, %p124
    %p126 = scmp.ne.s32.totalorder %s115, %s118
    %p127 = scmp.eq.s32.totalorder %s16, 1
    %p128 = por %p126, %p127
    %p129 = scmp.ne.s32.totalorder %s118, %s119
    %p130 = scmp.eq.s32.totalorder %s16, 0
    %p131 = por %p129, %p130
    %p132 = scmp.ne.s32.totalorder %s118, %s119
    %p133 = scmp.eq.s32.totalorder %s17, 1
    %p134 = por %p132, %p133
    %p136 = scmp.ne.s32.totalorder %s119, %s135
    %p137 = scmp.eq.s32.totalorder %s17, 0
    %p138 = por %p136, %p137
    %s139 = ssub.s32 %s18, %s30
    %p140 = scmp.eq.s32.totalorder %s139, 0
    %s142 = sadd.s32 %s141, 1
    %s143 = scalar_select %p140, %s141, %s142
    %p146 = pneg %p140
    %p147 = scmp.eq.s32.totalorder %s11, 1
    %p148 = por %p146, %p147
    %p149 = scmp.ne.s32.totalorder %s141, %s144
    %p150 = scmp.eq.s32.totalorder %s11, 0
    %p151 = por %p149, %p150
    %p152 = scmp.ne.s32.totalorder %s141, %s144
    %p153 = scmp.eq.s32.totalorder %s16, 1
    %p154 = por %p152, %p153
    %p155 = scmp.ne.s32.totalorder %s144, %s145
    %p156 = scmp.eq.s32.totalorder %s16, 0
    %p157 = por %p155, %p156
    %p158 = scmp.ne.s32.totalorder %s144, %s145
    %p159 = scmp.eq.s32.totalorder %s17, 1
    %p160 = por %p158, %p159
    %p162 = scmp.ne.s32.totalorder %s145, %s161
    %p163 = scmp.eq.s32.totalorder %s17, 0
    %p164 = por %p162, %p163
    %p165 = scmp.le.s32.totalorder 1, %s11
    %p166 = scmp.lt.s32.totalorder %s11, 3
    %p167 = pnand %p165, %p166
    %p168 = pneg %p167
    // Predicated region
    $region9: #{_run_loss_kernel.1} parent=5 // pred_check
      _
    $region10: #{_run_loss_kernel.1} parent=5 // pred_check_branch
      %170 = sbr.rel (%p167) target = $region12
    $region11: #{_run_loss_kernel.1} parent=5 // pred_region
      %s171 = ssub.s32 %s11, 1
    $region12: #{_run_loss_kernel.1} parent=5 // pred_fallthru
      _
    %p172 = scmp.lt.s32.totalorder %s11, 2
    // Predicated region
    $region13: #{_run_loss_kernel.1} parent=5 // pred_check
      %p173 = pneg %p172
    $region14: #{_run_loss_kernel.1} parent=5 // pred_check_branch
      %175 = sbr.rel (%p173) target = $region16
    $region15: #{_run_loss_kernel.1} parent=5 // pred_region
      // Predicated region
      $region17: #{_run_loss_kernel.1} parent=15 // pred_check
        %p176 = pneg %p45
      $region18: #{_run_loss_kernel.1} parent=15 // pred_check_branch
        %178 = sbr.rel (%p176) target = $region20
      $region19: #{_run_loss_kernel.1} parent=15 // pred_region
        %p179 = scmp.lt.s32.totalorder %s18, 1
        %s180 = scalar_select %p179, %s18, 1
        %p181 = scmp.lt.s32.totalorder %s19, 0
        %s182 = scalar_select %p181, %s19, 0
        %s183 = sadd.s32 %s182, %s180
        %s184 = smul.addr %s183, 8
        %s185 = scalar_lea.vmem %s0, %s184
      $region20: #{_run_loss_kernel.1} parent=15 // pred_fallthru
        _
      // Predicated region
      $region21: #{_run_loss_kernel.1} parent=15 // pred_check
        %p186 = pneg %p73
      $region22: #{_run_loss_kernel.1} parent=15 // pred_check_branch
        %188 = sbr.rel (%p186) target = $region24
      $region23: #{_run_loss_kernel.1} parent=15 // pred_region
        %p189 = scmp.lt.s32.totalorder %s18, 1
        %s190 = scalar_select %p189, %s18, 1
        %p191 = scmp.lt.s32.totalorder %s19, 0
        %s192 = scalar_select %p191, %s19, 0
        %s193 = sadd.s32 %s192, %s190
        %s194 = smul.addr %s193, 8
        %s195 = scalar_lea.vmem %s1, %s194
      $region24: #{_run_loss_kernel.1} parent=15 // pred_fallthru
        _
    $region16: #{_run_loss_kernel.1} parent=5 // pred_fallthru
      _
    %p196 = scmp.le.s32.totalorder 1, %s11
    %p197 = scmp.lt.s32.totalorder %s11, 3
    %p198 = pnand %p196, %p197
    %p199 = pneg %p198
    // Predicated region
    $region25: #{_run_loss_kernel.1} parent=5 // pred_check
      _
    $region26: #{_run_loss_kernel.1} parent=5 // pred_check_branch
      %201 = sbr.rel (%p198) target = $region28
    $region27: #{_run_loss_kernel.1} parent=5 // pred_region
      %s202 = ssub.s32 %s11, 1
      %p203 = scmp.lt.s32.totalorder %s20, 1
      %s204 = scalar_select %p203, %s20, 1
      %p205 = scmp.lt.s32.totalorder %s21, 0
      %s206 = scalar_select %p205, %s21, 0
      %s207 = sadd.s32 %s206, %s204
      %s208 = smul.addr %s207, 8
      %s209 = scalar_lea.vmem %s0, %s208
      %p210 = pneg %p51
      %p211 = pneg %p48
      %p212 = scmp.lt.s32.totalorder %s20, 1
      %s213 = scalar_select %p212, %s20, 1
      %p214 = scmp.lt.s32.totalorder %s21, 0
      %s215 = scalar_select %p214, %s21, 0
      %s216 = sadd.s32 %s215, %s213
      %s217 = smul.addr %s216, 8
      %s218 = scalar_lea.vmem %s1, %s217
      %p219 = pneg %p79
      %p220 = pneg %p76
      %p221 = pneg %p105
      %p222 = pneg %p102
      %p223 = scmp.lt.s32.totalorder %s20, 1
      %s224 = scalar_select %p223, %s20, 1
      %s225 = smul.addr %s224, 8
      %s226 = scalar_lea.vmem %s2, %s225
      %p227 = pneg %p131
      %p228 = pneg %p128
      %p229 = scmp.lt.s32.totalorder %s20, 1
      %s230 = scalar_select %p229, %s20, 1
      %s231 = smul.addr %s230, 8
      %s232 = scalar_lea.vmem %s3, %s231
      %p233 = pneg %p157
      %p234 = pneg %p154
      %p235 = scmp.lt.s32.totalorder %s20, 1
      %s236 = scalar_select %p235, %s20, 1
      %s237 = smul.addr %s236, 8
      %s238 = scalar_lea.vmem %s4, %s237
      %p239 = scmp.lt.s32.totalorder %s20, 1
      %s240 = scalar_select %p239, %s20, 1
      %p241 = scmp.lt.s32.totalorder %s21, 0
      %s242 = scalar_select %p241, %s21, 0
      %s243 = sadd.s32 %s242, %s240
      %s244 = smul.addr %s243, 8
      %s245 = scalar_lea.vmem %s0, %s244
      %p246 = scmp.lt.s32.totalorder %s20, 1
      %s247 = scalar_select %p246, %s20, 1
      %p248 = scmp.lt.s32.totalorder %s21, 0
      %s249 = scalar_select %p248, %s21, 0
      %s250 = sadd.s32 %s249, %s247
      %s251 = smul.addr %s250, 8
      %s252 = scalar_lea.vmem %s1, %s251
      %p253 = scmp.lt.s32.totalorder %s20, 1
      %s254 = scalar_select %p253, %s20, 1
      %s255 = smul.addr %s254, 8
      %s256 = scalar_lea.vmem %s2, %s255
      %p257 = scmp.lt.s32.totalorder %s20, 1
      %s258 = scalar_select %p257, %s20, 1
      %s259 = smul.addr %s258, 8
      %s260 = scalar_lea.vmem %s3, %s259
      %p261 = scmp.lt.s32.totalorder %s20, 1
      %s262 = scalar_select %p261, %s20, 1
      %s263 = smul.addr %s262, 8
      %s264 = scalar_lea.vmem %s4, %s263
      %v265 = vld [vmem:[%s245] sm:$0xff]
      %v266 = vld [vmem:[%s252] sm:$0xff]
      %v267 = vmul.f32 %v265, %v266
      %v268 = vadd.f32 %v265, %v266
      %v269 = vlog2.pop %v265
      %v270 = vmul.f32 %v269, 0.6931472
      %v271 = vmax.f32 %v270, -100.0
      %v272 = vsub.f32 1.0, %v265
      %v273 = vlog2.pop %v272
      %v274 = vmul.f32 %v273, 0.6931472
      %v275 = vmax.f32 %v274, -100.0
      %v276 = vsub.f32 %v271, %v275
      %v277 = vmul.f32 %v266, %v276
      %v278 = vadd.f32 %v277, %v275
      %p279 = scmp.eq.s32.totalorder %s21, 0
      // Predicated region
      $region29: #{_run_loss_kernel.1} parent=27 // pred_check
        %p280 = pneg %p279
      $region30: #{_run_loss_kernel.1} parent=27 // pred_check_branch
        %282 = sbr.rel (%p280) target = $region32
      $region31: #{_run_loss_kernel.1} parent=27 // pred_region
        %283 = vst [vmem:[%s256] sm:$0xff] 0.0
        %284 = vst [vmem:[%s260] sm:$0xff] 0.0
        %285 = vst [vmem:[%s264] sm:$0xff] 0.0
      $region32: #{_run_loss_kernel.1} parent=27 // pred_fallthru
        _
      %v286 = vld [vmem:[%s256] sm:$0xff]
      %v287 = vadd.f32 %v286, %v267
      %288 = vst [vmem:[%s256] sm:$0xff] %v287
      %v289 = vld [vmem:[%s260] sm:$0xff]
      %v290 = vadd.f32 %v289, %v268
      %291 = vst [vmem:[%s260] sm:$0xff] %v290
      %v292 = vld [vmem:[%s264] sm:$0xff]
      %v293 = vadd.f32 %v292, %v278
      %294 = vst [vmem:[%s264] sm:$0xff] %v293
      %p295 = scmp.lt.s32.totalorder %s20, 1
      %s296 = scalar_select %p295, %s20, 1
      %s297 = smul.addr %s296, 8
      %s298 = scalar_lea.vmem %s2, %s297
      %p299 = scmp.lt.s32.totalorder %s20, 1
      %s300 = scalar_select %p299, %s20, 1
      %s301 = smul.addr %s300, 8
      %s302 = scalar_lea.vmem %s3, %s301
      %p303 = scmp.lt.s32.totalorder %s20, 1
      %s304 = scalar_select %p303, %s20, 1
      %s305 = smul.addr %s304, 8
      %s306 = scalar_lea.vmem %s4, %s305
      // Predicated region
      $region33: #{_run_loss_kernel.1} parent=27 // pred_check
        %p307 = pneg %p102
      $region34: #{_run_loss_kernel.1} parent=27 // pred_check_branch
        %309 = sbr.rel (%p307) target = $region36
      $region35: #{_run_loss_kernel.1} parent=27 // pred_region
        _
      $region36: #{_run_loss_kernel.1} parent=27 // pred_fallthru
        _
      // Predicated region
      $region37: #{_run_loss_kernel.1} parent=27 // pred_check
        %p310 = pneg %p128
      $region38: #{_run_loss_kernel.1} parent=27 // pred_check_branch
        %312 = sbr.rel (%p310) target = $region40
      $region39: #{_run_loss_kernel.1} parent=27 // pred_region
        _
      $region40: #{_run_loss_kernel.1} parent=27 // pred_fallthru
        _
      // Predicated region
      $region41: #{_run_loss_kernel.1} parent=27 // pred_check
        %p313 = pneg %p154
      $region42: #{_run_loss_kernel.1} parent=27 // pred_check_branch
        %315 = sbr.rel (%p313) target = $region44
      $region43: #{_run_loss_kernel.1} parent=27 // pred_region
        _
      $region44: #{_run_loss_kernel.1} parent=27 // pred_fallthru
        _
    $region28: #{_run_loss_kernel.1} parent=5 // pred_fallthru
      _
    %p316 = scmp.le.s32.totalorder 2, %s11
    // Predicated region
    $region45: #{_run_loss_kernel.1} parent=5 // pred_check
      %p317 = pneg %p316
    $region46: #{_run_loss_kernel.1} parent=5 // pred_check_branch
      %319 = sbr.rel (%p317) target = $region48
    $region47: #{_run_loss_kernel.1} parent=5 // pred_region
      %s320 = ssub.s32 %s11, 2
      // Predicated region
      $region49: #{_run_loss_kernel.1} parent=47 // pred_check
        %p321 = pneg %p108
      $region50: #{_run_loss_kernel.1} parent=47 // pred_check_branch
        %323 = sbr.rel (%p321) target = $region52
      $region51: #{_run_loss_kernel.1} parent=47 // pred_region
        %p324 = scmp.lt.s32.totalorder %s22, 1
        %s325 = scalar_select %p324, %s22, 1
        %s326 = smul.addr %s325, 8
        %s327 = scalar_lea.vmem %s2, %s326
      $region52: #{_run_loss_kernel.1} parent=47 // pred_fallthru
        _
      // Predicated region
      $region53: #{_run_loss_kernel.1} parent=47 // pred_check
        %p328 = pneg %p134
      $region54: #{_run_loss_kernel.1} parent=47 // pred_check_branch
        %330 = sbr.rel (%p328) target = $region56
      $region55: #{_run_loss_kernel.1} parent=47 // pred_region
        %p331 = scmp.lt.s32.totalorder %s22, 1
        %s332 = scalar_select %p331, %s22, 1
        %s333 = smul.addr %s332, 8
        %s334 = scalar_lea.vmem %s3, %s333
      $region56: #{_run_loss_kernel.1} parent=47 // pred_fallthru
        _
      // Predicated region
      $region57: #{_run_loss_kernel.1} parent=47 // pred_check
        %p335 = pneg %p160
      $region58: #{_run_loss_kernel.1} parent=47 // pred_check_branch
        %337 = sbr.rel (%p335) target = $region60
      $region59: #{_run_loss_kernel.1} parent=47 // pred_region
        %p338 = scmp.lt.s32.totalorder %s22, 1
        %s339 = scalar_select %p338, %s22, 1
        %s340 = smul.addr %s339, 8
        %s341 = scalar_lea.vmem %s4, %s340
      $region60: #{_run_loss_kernel.1} parent=47 // pred_fallthru
        _
    $region48: #{_run_loss_kernel.1} parent=5 // pred_fallthru
      _
  $region6: #{_run_loss_kernel.1} parent=0 // loop_footer
    %s15 = sadd.s32 1, %s11
  $region7: #{_run_loss_kernel.1} parent=0 // loop_footer_branch
    %10 = sbr.rel target = $region3
  $region8: #{_run_loss_kernel.1} parent=0 // loop_exit
    _

</llo_original>
